<compile_context>
chip_gen: v5e
topology: v5e:2x2
jax: 0.10.0
libtpu: 0.0.40
codegen_flags: <defaults>
</compile_context>

<pallas_src>
import functools

import jax
import jax.numpy as jnp
from jax import lax
from jax.experimental import pallas as pl
from jax.experimental.pallas import tpu as pltpu

MIN_STDV = 1e-8


def _standardize_kernel(y_ref, yvar_ref, ytf_ref, yvartf_ref, means_ref,
                        stdvs_ref, *, n, min_stdv):
    # y_ref / yvar_ref: (bt, n, m) -- reduction axis n sits on the sublanes.
    y = y_ref[...].astype(jnp.float32)
    yvar = yvar_ref[...].astype(jnp.float32)

    inv_n = jnp.float32(1.0 / n)
    inv_nm1 = jnp.float32(1.0 / (n - 1))

    # mean over the sample axis (torch dim=-2), keepdim.
    mean = jnp.sum(y, axis=1, keepdims=True) * inv_n          # (bt, 1, m)
    centered = y - mean

    # unbiased variance (torch.Tensor.std default: ddof=1).
    var = jnp.sum(centered * centered, axis=1, keepdims=True) * inv_nm1

    # rsqrt on the EUP; std = var * rstd == sqrt(var).  When var == 0 this
    # yields NaN, which fails the >= comparison and falls into the clamp,
    # exactly matching the torch min_stdv behavior (std -> 1.0, only de-mean).
    rstd = lax.rsqrt(var)
    std = var * rstd
    ok = std >= jnp.float32(min_stdv)
    std = jnp.where(ok, std, jnp.float32(1.0))
    rstd = jnp.where(ok, rstd, jnp.float32(1.0))

    ytf_ref[...] = (centered * rstd).astype(ytf_ref.dtype)
    yvartf_ref[...] = (yvar * (rstd * rstd)).astype(yvartf_ref.dtype)
    means_ref[...] = mean.astype(means_ref.dtype)
    stdvs_ref[...] = std.astype(stdvs_ref.dtype)


def _round_up(x, k):
    return (x + k - 1) // k * k


def _pick_batch_tile(B, n, m, itemsize, target_bytes=2 << 20):
    """Batch tile sized by the VMEM-padded block footprint (~2 MiB/stream)."""
    # VMEM pads the last two dims of each (bt, n, m) block to (8, 128) tiles.
    per_batch = _round_up(n, 8) * _round_up(m, 128) * itemsize
    bt = max(1, min(B, target_bytes // max(per_batch, 1)))
    if B > 1:
        # Keep several grid steps when possible: enables DMA/compute
        # pipelining and dual-TensorCore sharding on v7x.
        bt = min(bt, max(1, pl.cdiv(B, min(B, 4))))
    return bt


def standardize_forward(Y, Yvar, min_stdv=MIN_STDV):
    """Y, Yvar: (B, n, m). Returns (Y_tf, Yvar_tf, means, stdvs)."""
    B, n, m = Y.shape
    if n < 2:
        # torch/botorch would produce NaN std here (divide by n-1 == 0).
        raise ValueError("Standardize requires at least 2 samples (n >= 2).")

    dtype = Y.dtype
    bt = _pick_batch_tile(B, n, m, jnp.dtype(dtype).itemsize)
    grid = (pl.cdiv(B, bt),)   # last block masked if B % bt != 0

    data_spec = pl.BlockSpec((bt, n, m), lambda b: (b, 0, 0))
    stat_spec = pl.BlockSpec((bt, 1, m), lambda b: (b, 0, 0))

    out_shapes = (
        jax.ShapeDtypeStruct((B, n, m), dtype),   # Y_tf
        jax.ShapeDtypeStruct((B, n, m), dtype),   # Yvar_tf
        jax.ShapeDtypeStruct((B, 1, m), dtype),   # means buffer
        jax.ShapeDtypeStruct((B, 1, m), dtype),   # stdvs buffer
    )

    kernel = functools.partial(_standardize_kernel, n=n, min_stdv=min_stdv)

    return pl.pallas_call(
        kernel,
        out_shape=out_shapes,
        grid_spec=pltpu.PrefetchScalarGridSpec(
            num_scalar_prefetch=0,
            grid=grid,
            in_specs=[data_spec, data_spec],
            out_specs=[data_spec, data_spec, stat_spec, stat_spec],
        ),
        compiler_params=pltpu.CompilerParams(
            dimension_semantics=("parallel",),
            # 4 streams x 2 pipeline buffers x ~2 MiB padded blocks + f32
            # temps stays well under 48 MiB (safe on v7x's 64 MiB VMEM and
            # conservative on v5e/v6e's 128 MiB).
            vmem_limit_bytes=48 << 20,
        ),
    )(Y, Yvar)


def _reference(Y, Yvar, min_stdv=MIN_STDV):
    n = Y.shape[-2]
    Yf = Y.astype(jnp.float32)
    mean = jnp.mean(Yf, axis=-2, keepdims=True)
    var = jnp.sum((Yf - mean) ** 2, axis=-2, keepdims=True) / (n - 1)
    std = jnp.sqrt(var)
    std = jnp.where(std >= min_stdv, std, jnp.ones_like(std))
    Y_tf = ((Yf - mean) / std).astype(Y.dtype)
    Yvar_tf = (Yvar.astype(jnp.float32) / (std * std)).astype(Yvar.dtype)
    return Y_tf, Yvar_tf, mean.astype(Y.dtype), std.astype(Y.dtype)


def _check(Y, Yvar):
    outs = standardize_forward(Y, Yvar)
    jax.block_until_ready(outs)
    refs = _reference(Y, Yvar)
    names = ("Y_tf", "Yvar_tf", "means", "stdvs")
    for name, got, ref in zip(names, outs, refs):
        assert got.shape == ref.shape, (name, got.shape, ref.shape)
        assert jnp.allclose(got, ref, atol=1e-5, rtol=1e-5), name


if __name__ == "__main__":
    key = jax.random.PRNGKey(0)
    k1, k2, k3, k4, k5, k6 = jax.random.split(key, 6)

    # Case 1: small botorch-style problem. batch=2, n=32 samples, m=8 outputs.
    B, n, m = 2, 32, 8
    Y = 3.0 * jax.random.normal(k1, (B, n, m), dtype=jnp.float32) + 1.5
    Yvar = jax.random.uniform(k2, (B, n, m), dtype=jnp.float32,
                              minval=0.01, maxval=0.1)
    _check(Y, Yvar)

    # Case 2: multiple parallel grid steps over the batch axis.
    B2, n2, m2 = 8, 16, 32
    Y2 = 2.0 * jax.random.normal(k3, (B2, n2, m2), dtype=jnp.float32) - 0.5
    Yvar2 = jax.random.uniform(k4, (B2, n2, m2), dtype=jnp.float32,
                               minval=0.01, maxval=0.1)
    _check(Y2, Yvar2)

    # Case 3: B not divisible by the batch tile -> masked final block.
    B3, n3, m3 = 5, 24, 4
    Y3 = 1.7 * jax.random.normal(k5, (B3, n3, m3), dtype=jnp.float32) + 0.3
    Yvar3 = jax.random.uniform(k6, (B3, n3, m3), dtype=jnp.float32,
                               minval=0.01, maxval=0.1)
    _check(Y3, Yvar3)

    print("KERNEL_OK")
</pallas_src>

<mosaic_0001>
module attributes {stable_mosaic.version = 11 : i64} {
  func.func @_standardize_kernel(%arg0: i32, %arg1: memref<1x32x8xf32, #tpu.memory_space<vmem>>, %arg2: memref<1x32x8xf32, #tpu.memory_space<vmem>>, %arg3: memref<1x32x8xf32, #tpu.memory_space<vmem>>, %arg4: memref<1x32x8xf32, #tpu.memory_space<vmem>>, %arg5: memref<1x1x8xf32, #tpu.memory_space<vmem>>, %arg6: memref<1x1x8xf32, #tpu.memory_space<vmem>>) attributes {dimension_semantics = [#tpu.dimension_semantics<parallel>], iteration_bounds = array<i64: 2>, scalar_prefetch = 0 : i64, scratch_operands = 0 : i64, tpu.core_type = #tpu.core_type<tc>, window_params = [{transform_indices = @transform_0, window_bounds = array<i64: 1, 32, 8>}, {transform_indices = @transform_1, window_bounds = array<i64: 1, 32, 8>}, {transform_indices = @transform_2, window_bounds = array<i64: 1, 32, 8>}, {transform_indices = @transform_3, window_bounds = array<i64: 1, 32, 8>}, {transform_indices = @transform_4, window_bounds = array<i64: 1, 1, 8>}, {transform_indices = @transform_5, window_bounds = array<i64: 1, 1, 8>}]} {
    %c0 = arith.constant 0 : index
    %c0_0 = arith.constant 0 : index
    %c0_1 = arith.constant 0 : index
    %0 = vector.load %arg1[%c0, %c0_0, %c0_1] : memref<1x32x8xf32, #tpu.memory_space<vmem>>, vector<1x32x8xf32>
    %c0_2 = arith.constant 0 : index
    %c0_3 = arith.constant 0 : index
    %c0_4 = arith.constant 0 : index
    %1 = vector.load %arg2[%c0_2, %c0_3, %c0_4] : memref<1x32x8xf32, #tpu.memory_space<vmem>>, vector<1x32x8xf32>
    %cst = arith.constant dense<0.000000e+00> : vector<1x8xf32>
    %2 = vector.multi_reduction <add>, %0, %cst [1] : vector<1x32x8xf32> to vector<1x8xf32>
    %3 = vector.shape_cast %2 : vector<1x8xf32> to vector<1x1x8xf32>
    %cst_5 = arith.constant 3.125000e-02 : f32
    %4 = vector.broadcast %cst_5 : f32 to vector<1x1x8xf32>
    %5 = arith.mulf %3, %4 : vector<1x1x8xf32>
    %6 = vector.broadcast %5 : vector<1x1x8xf32> to vector<1x32x8xf32>
    %7 = arith.subf %0, %6 : vector<1x32x8xf32>
    %8 = arith.mulf %7, %7 : vector<1x32x8xf32>
    %cst_6 = arith.constant dense<0.000000e+00> : vector<1x8xf32>
    %9 = vector.multi_reduction <add>, %8, %cst_6 [1] : vector<1x32x8xf32> to vector<1x8xf32>
    %10 = vector.shape_cast %9 : vector<1x8xf32> to vector<1x1x8xf32>
    %cst_7 = arith.constant 0.0322580636 : f32
    %11 = vector.broadcast %cst_7 : f32 to vector<1x1x8xf32>
    %12 = arith.mulf %10, %11 : vector<1x1x8xf32>
    %13 = math.rsqrt %12 : vector<1x1x8xf32>
    %14 = arith.mulf %12, %13 : vector<1x1x8xf32>
    %cst_8 = arith.constant 9.99999993E-9 : f32
    %15 = vector.broadcast %cst_8 : f32 to vector<1x1x8xf32>
    %16 = arith.cmpf oge, %14, %15 : vector<1x1x8xf32>
    %cst_9 = arith.constant 1.000000e+00 : f32
    %17 = vector.broadcast %cst_9 : f32 to vector<1x1x8xf32>
    %18 = arith.select %16, %14, %17 : vector<1x1x8xi1>, vector<1x1x8xf32>
    %cst_10 = arith.constant 1.000000e+00 : f32
    %19 = vector.broadcast %cst_10 : f32 to vector<1x1x8xf32>
    %20 = arith.select %16, %13, %19 : vector<1x1x8xi1>, vector<1x1x8xf32>
    %21 = vector.broadcast %20 : vector<1x1x8xf32> to vector<1x32x8xf32>
    %22 = arith.mulf %7, %21 : vector<1x32x8xf32>
    %c0_11 = arith.constant 0 : index
    %c0_12 = arith.constant 0 : index
    %c0_13 = arith.constant 0 : index
    %23 = vector.load %arg3[%c0_11, %c0_12, %c0_13] : memref<1x32x8xf32, #tpu.memory_space<vmem>>, vector<1x32x8xf32>
    tpu.vector_store %arg3[%c0_11, %c0_12, %c0_13], %22 {strides = array<i32>} : memref<1x32x8xf32, #tpu.memory_space<vmem>>, vector<1x32x8xf32>,
    %24 = arith.mulf %20, %20 : vector<1x1x8xf32>
    %25 = vector.broadcast %24 : vector<1x1x8xf32> to vector<1x32x8xf32>
    %26 = arith.mulf %1, %25 : vector<1x32x8xf32>
    %c0_14 = arith.constant 0 : index
    %c0_15 = arith.constant 0 : index
    %c0_16 = arith.constant 0 : index
    %27 = vector.load %arg4[%c0_14, %c0_15, %c0_16] : memref<1x32x8xf32, #tpu.memory_space<vmem>>, vector<1x32x8xf32>
    tpu.vector_store %arg4[%c0_14, %c0_15, %c0_16], %26 {strides = array<i32>} : memref<1x32x8xf32, #tpu.memory_space<vmem>>, vector<1x32x8xf32>,
    %c0_17 = arith.constant 0 : index
    %c0_18 = arith.constant 0 : index
    %c0_19 = arith.constant 0 : index
    %28 = vector.load %arg5[%c0_17, %c0_18, %c0_19] : memref<1x1x8xf32, #tpu.memory_space<vmem>>, vector<1x1x8xf32>
    tpu.vector_store %arg5[%c0_17, %c0_18, %c0_19], %5 {strides = array<i32>} : memref<1x1x8xf32, #tpu.memory_space<vmem>>, vector<1x1x8xf32>,
    %c0_20 = arith.constant 0 : index
    %c0_21 = arith.constant 0 : index
    %c0_22 = arith.constant 0 : index
    %29 = vector.load %arg6[%c0_20, %c0_21, %c0_22] : memref<1x1x8xf32, #tpu.memory_space<vmem>>, vector<1x1x8xf32>
    tpu.vector_store %arg6[%c0_20, %c0_21, %c0_22], %18 {strides = array<i32>} : memref<1x1x8xf32, #tpu.memory_space<vmem>>, vector<1x1x8xf32>,
    return
  }
  func.func @transform_0(%arg0: i32) -> (i32, i32, i32) {
    %c0_i32 = arith.constant 0 : i32
    %c0_i32_0 = arith.constant 0 : i32
    %c0_i32_1 = arith.constant 0 : i32
    return %arg0, %c0_i32, %c0_i32_0 : i32, i32, i32
  }
  func.func @transform_1(%arg0: i32) -> (i32, i32, i32) {
    %c0_i32 = arith.constant 0 : i32
    %c0_i32_0 = arith.constant 0 : i32
    %c0_i32_1 = arith.constant 0 : i32
    return %arg0, %c0_i32, %c0_i32_0 : i32, i32, i32
  }
  func.func @transform_2(%arg0: i32) -> (i32, i32, i32) {
    %c0_i32 = arith.constant 0 : i32
    %c0_i32_0 = arith.constant 0 : i32
    %c0_i32_1 = arith.constant 0 : i32
    return %arg0, %c0_i32, %c0_i32_0 : i32, i32, i32
  }
  func.func @transform_3(%arg0: i32) -> (i32, i32, i32) {
    %c0_i32 = arith.constant 0 : i32
    %c0_i32_0 = arith.constant 0 : i32
    %c0_i32_1 = arith.constant 0 : i32
    return %arg0, %c0_i32, %c0_i32_0 : i32, i32, i32
  }
  func.func @transform_4(%arg0: i32) -> (i32, i32, i32) {
    %c0_i32 = arith.constant 0 : i32
    %c0_i32_0 = arith.constant 0 : i32
    %c0_i32_1 = arith.constant 0 : i32
    return %arg0, %c0_i32, %c0_i32_0 : i32, i32, i32
  }
  func.func @transform_5(%arg0: i32) -> (i32, i32, i32) {
    %c0_i32 = arith.constant 0 : i32
    %c0_i32_0 = arith.constant 0 : i32
    %c0_i32_1 = arith.constant 0 : i32
    return %arg0, %c0_i32, %c0_i32_0 : i32, i32, i32
  }
}

</mosaic_0001>

<llo_original>
// kernel: tpu_custom_call.1
$region0: #{tpu_custom_call.1}
  #allocation0 [shape = 'u32[]', space=smem, size = 0x4, offset = 0x4, fixed_abs, tag = 'smem constant byte address 0x4 - core index']
  #allocation1 [shape = 'u32[72,128]{1,0:T(1,128)}', space=vmem, size = 0x9000, scoped, tag = 'internal scratch']
  %s0 = inlined_call_operand.vmem [shape: f32[2,32,8], index: 0, kind: input, shape index: {}]
  %s1 = inlined_call_operand.vmem [shape: f32[2,32,8], index: 1, kind: input, shape index: {}]
  %s2 = inlined_call_operand.vmem [shape: f32[2,32,8], index: 2, kind: output, shape index: {0}]
  %s3 = inlined_call_operand.vmem [shape: f32[2,32,8], index: 3, kind: output, shape index: {1}]
  %s4 = inlined_call_operand.hbm [shape: f32[2,1,8], index: 4, kind: output, shape index: {2}]
  %s5 = inlined_call_operand.hbm [shape: f32[2,1,8], index: 5, kind: output, shape index: {3}]
  %6 = xla_tuple %s2, %s3, %s4, %s5
  %s7 = sld [smem:[#allocation0]]
  $region65: #{tpu_custom_call.1} parent=0
    _
  %s9 = ssub.s32 1, %s7
  %s10 = scalar_select 0, %s9, %s7
  $region1: #{tpu_custom_call.1} parent=0
    #allocation2 [shape = 'u8[1024]{0}', space=vmem, size = 0x400, scoped, tag = 'output window, operand 2']
    #allocation3 [shape = 's32[2]{0}', space=sflag, size = 0x8, scoped, tag = 'scoped memory for tpu_custom_call.1']
    #allocation4 [shape = 'u8[1024]{0}', space=vmem, size = 0x400, scoped, tag = 'output window, operand 3']
    #allocation5 [shape = 's32[2]{0}', space=sflag, size = 0x8, scoped, tag = 'scoped memory for tpu_custom_call.1']
    %11 = vsyncpa [#allocation3], 0
    %s12 = scalar_lea.sflag [#allocation3], 1
    %13 = vsyncpa %s12, 0
    %14 = vsyncpa [#allocation5], 0
    %s15 = scalar_lea.sflag [#allocation5], 1
    %16 = vsyncpa %s15, 0
    loop: start=0, step=1, limit=4
    $region2: #{tpu_custom_call.1} parent=1 // loop_pre_header
      _
    $region3: #{tpu_custom_call.1} parent=1 // loop_header
      %s18 = sphi 0, %s22
      %p19 = scmp.ge.s32.totalorder %s18, 4
      %s28 = sphi 0, %s30
      %s31 = sphi 0, %s28
      %s32 = sphi 0, %s31
      %s48 = sphi 0, %s32
      %s54 = sphi 0, %s56
      %s57 = sphi 0, %s54
      %s58 = sphi 0, %s57
      %s74 = sphi 0, %s58
      %s80 = sphi 0, %s82
      %s83 = sphi 0, %s80
      %s84 = sphi 0, %s83
      %s100 = sphi 0, %s84
      %s106 = sphi 0, %s108
      %s109 = sphi 0, %s106
      %s110 = sphi 0, %s109
      %s126 = sphi 0, %s110
      %s132 = sphi 0, %s134
      %s135 = sphi 0, %s132
      %s136 = sphi 0, %s135
      %s152 = sphi 0, %s136
      %s158 = sphi 0, %s160
      %s161 = sphi 0, %s158
      %s162 = sphi 0, %s161
      %s178 = sphi 0, %s162
    $region4: #{tpu_custom_call.1} parent=1 // loop_header_branch
      %21 = sbr.rel (%p19) target = $region8
    $region5: #{tpu_custom_call.1} parent=1 // loop_body
      %s23 = ssub.s32 %s18, 1
      %s24 = ssub.s32 %s18, 2
      %s25 = sadd.s32 %s18, 1
      %s26 = ssub.s32 %s18, %s25
      %p27 = scmp.eq.s32.totalorder %s26, 0
      %s29 = sadd.s32 %s28, 1
      %s30 = scalar_select %p27, %s28, %s29
      %p33 = pneg %p27
      %p34 = scmp.eq.s32.totalorder %s18, 1
      %p35 = por %p33, %p34
      %p36 = scmp.ne.s32.totalorder %s28, %s31
      %p37 = scmp.eq.s32.totalorder %s18, 0
      %p38 = por %p36, %p37
      %p39 = scmp.ne.s32.totalorder %s28, %s31
      %p40 = scmp.eq.s32.totalorder %s23, 1
      %p41 = por %p39, %p40
      %p42 = scmp.ne.s32.totalorder %s31, %s32
      %p43 = scmp.eq.s32.totalorder %s23, 0
      %p44 = por %p42, %p43
      %p45 = scmp.ne.s32.totalorder %s31, %s32
      %p46 = scmp.eq.s32.totalorder %s24, 1
      %p47 = por %p45, %p46
      %p49 = scmp.ne.s32.totalorder %s32, %s48
      %p50 = scmp.eq.s32.totalorder %s24, 0
      %p51 = por %p49, %p50
      %s52 = ssub.s32 %s18, %s25
      %p53 = scmp.eq.s32.totalorder %s52, 0
      %s55 = sadd.s32 %s54, 1
      %s56 = scalar_select %p53, %s54, %s55
      %p59 = pneg %p53
      %p60 = scmp.eq.s32.totalorder %s18, 1
      %p61 = por %p59, %p60
      %p62 = scmp.ne.s32.totalorder %s54, %s57
      %p63 = scmp.eq.s32.totalorder %s18, 0
      %p64 = por %p62, %p63
      %p65 = scmp.ne.s32.totalorder %s54, %s57
      %p66 = scmp.eq.s32.totalorder %s23, 1
      %p67 = por %p65, %p66
      %p68 = scmp.ne.s32.totalorder %s57, %s58
      %p69 = scmp.eq.s32.totalorder %s23, 0
      %p70 = por %p68, %p69
      %p71 = scmp.ne.s32.totalorder %s57, %s58
      %p72 = scmp.eq.s32.totalorder %s24, 1
      %p73 = por %p71, %p72
      %p75 = scmp.ne.s32.totalorder %s58, %s74
      %p76 = scmp.eq.s32.totalorder %s24, 0
      %p77 = por %p75, %p76
      %s78 = ssub.s32 %s18, %s25
      %p79 = scmp.eq.s32.totalorder %s78, 0
      %s81 = sadd.s32 %s80, 1
      %s82 = scalar_select %p79, %s80, %s81
      %p85 = pneg %p79
      %p86 = scmp.eq.s32.totalorder %s18, 1
      %p87 = por %p85, %p86
      %p88 = scmp.ne.s32.totalorder %s80, %s83
      %p89 = scmp.eq.s32.totalorder %s18, 0
      %p90 = por %p88, %p89
      %p91 = scmp.ne.s32.totalorder %s80, %s83
      %p92 = scmp.eq.s32.totalorder %s23, 1
      %p93 = por %p91, %p92
      %p94 = scmp.ne.s32.totalorder %s83, %s84
      %p95 = scmp.eq.s32.totalorder %s23, 0
      %p96 = por %p94, %p95
      %p97 = scmp.ne.s32.totalorder %s83, %s84
      %p98 = scmp.eq.s32.totalorder %s24, 1
      %p99 = por %p97, %p98
      %p101 = scmp.ne.s32.totalorder %s84, %s100
      %p102 = scmp.eq.s32.totalorder %s24, 0
      %p103 = por %p101, %p102
      %s104 = ssub.s32 %s18, %s25
      %p105 = scmp.eq.s32.totalorder %s104, 0
      %s107 = sadd.s32 %s106, 1
      %s108 = scalar_select %p105, %s106, %s107
      %p111 = pneg %p105
      %p112 = scmp.eq.s32.totalorder %s18, 1
      %p113 = por %p111, %p112
      %p114 = scmp.ne.s32.totalorder %s106, %s109
      %p115 = scmp.eq.s32.totalorder %s18, 0
      %p116 = por %p114, %p115
      %p117 = scmp.ne.s32.totalorder %s106, %s109
      %p118 = scmp.eq.s32.totalorder %s23, 1
      %p119 = por %p117, %p118
      %p120 = scmp.ne.s32.totalorder %s109, %s110
      %p121 = scmp.eq.s32.totalorder %s23, 0
      %p122 = por %p120, %p121
      %p123 = scmp.ne.s32.totalorder %s109, %s110
      %p124 = scmp.eq.s32.totalorder %s24, 1
      %p125 = por %p123, %p124
      %p127 = scmp.ne.s32.totalorder %s110, %s126
      %p128 = scmp.eq.s32.totalorder %s24, 0
      %p129 = por %p127, %p128
      %s130 = ssub.s32 %s18, %s25
      %p131 = scmp.eq.s32.totalorder %s130, 0
      %s133 = sadd.s32 %s132, 1
      %s134 = scalar_select %p131, %s132, %s133
      %p137 = pneg %p131
      %p138 = scmp.eq.s32.totalorder %s18, 1
      %p139 = por %p137, %p138
      %p140 = scmp.ne.s32.totalorder %s132, %s135
      %p141 = scmp.eq.s32.totalorder %s18, 0
      %p142 = por %p140, %p141
      %p143 = scmp.ne.s32.totalorder %s132, %s135
      %p144 = scmp.eq.s32.totalorder %s23, 1
      %p145 = por %p143, %p144
      %p146 = scmp.ne.s32.totalorder %s135, %s136
      %p147 = scmp.eq.s32.totalorder %s23, 0
      %p148 = por %p146, %p147
      %p149 = scmp.ne.s32.totalorder %s135, %s136
      %p150 = scmp.eq.s32.totalorder %s24, 1
      %p151 = por %p149, %p150
      %p153 = scmp.ne.s32.totalorder %s136, %s152
      %p154 = scmp.eq.s32.totalorder %s24, 0
      %p155 = por %p153, %p154
      %s156 = ssub.s32 %s18, %s25
      %p157 = scmp.eq.s32.totalorder %s156, 0
      %s159 = sadd.s32 %s158, 1
      %s160 = scalar_select %p157, %s158, %s159
      %p163 = pneg %p157
      %p164 = scmp.eq.s32.totalorder %s18, 1
      %p165 = por %p163, %p164
      %p166 = scmp.ne.s32.totalorder %s158, %s161
      %p167 = scmp.eq.s32.totalorder %s18, 0
      %p168 = por %p166, %p167
      %p169 = scmp.ne.s32.totalorder %s158, %s161
      %p170 = scmp.eq.s32.totalorder %s23, 1
      %p171 = por %p169, %p170
      %p172 = scmp.ne.s32.totalorder %s161, %s162
      %p173 = scmp.eq.s32.totalorder %s23, 0
      %p174 = por %p172, %p173
      %p175 = scmp.ne.s32.totalorder %s161, %s162
      %p176 = scmp.eq.s32.totalorder %s24, 1
      %p177 = por %p175, %p176
      %p179 = scmp.ne.s32.totalorder %s162, %s178
      %p180 = scmp.eq.s32.totalorder %s24, 0
      %p181 = por %p179, %p180
      %p182 = scmp.le.s32.totalorder 1, %s18
      %p183 = scmp.lt.s32.totalorder %s18, 3
      %p184 = pnand %p182, %p183
      %p185 = pneg %p184
      // Predicated region
      $region9: #{tpu_custom_call.1} parent=5 // pred_check
        _
      $region10: #{tpu_custom_call.1} parent=5 // pred_check_branch
        %187 = sbr.rel (%p184) target = $region12
      $region11: #{tpu_custom_call.1} parent=5 // pred_region
        %s188 = ssub.s32 %s18, 1
      $region12: #{tpu_custom_call.1} parent=5 // pred_fallthru
        _
      %p189 = scmp.lt.s32.totalorder %s18, 2
      // Predicated region
      $region13: #{tpu_custom_call.1} parent=5 // pred_check
        %p190 = pneg %p189
      $region14: #{tpu_custom_call.1} parent=5 // pred_check_branch
        %192 = sbr.rel (%p190) target = $region16
      $region15: #{tpu_custom_call.1} parent=5 // pred_region
        // Predicated region
        $region17: #{tpu_custom_call.1} parent=15 // pred_check
          %p193 = pneg %p38
        $region18: #{tpu_custom_call.1} parent=15 // pred_check_branch
          %195 = sbr.rel (%p193) target = $region20
        $region19: #{tpu_custom_call.1} parent=15 // pred_region
          %p196 = scmp.lt.s32.totalorder %s18, 1
          %s197 = scalar_select %p196, %s18, 1
          %s198 = smul.addr %s197, 4
          %s199 = smul.addr %s198, 8
          %s200 = scalar_lea.vmem %s0, %s199
        $region20: #{tpu_custom_call.1} parent=15 // pred_fallthru
          _
        // Predicated region
        $region21: #{tpu_custom_call.1} parent=15 // pred_check
          %p201 = pneg %p64
        $region22: #{tpu_custom_call.1} parent=15 // pred_check_branch
          %203 = sbr.rel (%p201) target = $region24
        $region23: #{tpu_custom_call.1} parent=15 // pred_region
          %p204 = scmp.lt.s32.totalorder %s18, 1
          %s205 = scalar_select %p204, %s18, 1
          %s206 = smul.addr %s205, 4
          %s207 = smul.addr %s206, 8
          %s208 = scalar_lea.vmem %s1, %s207
        $region24: #{tpu_custom_call.1} parent=15 // pred_fallthru
          _
      $region16: #{tpu_custom_call.1} parent=5 // pred_fallthru
        _
      %p209 = scmp.le.s32.totalorder 1, %s18
      %p210 = scmp.lt.s32.totalorder %s18, 3
      %p211 = pnand %p209, %p210
      %p212 = pneg %p211
      // Predicated region
      $region25: #{tpu_custom_call.1} parent=5 // pred_check
        _
      $region26: #{tpu_custom_call.1} parent=5 // pred_check_branch
        %214 = sbr.rel (%p211) target = $region28
      $region27: #{tpu_custom_call.1} parent=5 // pred_region
        %s215 = ssub.s32 %s18, 1
        %p216 = scmp.lt.s32.totalorder %s23, 1
        %s217 = scalar_select %p216, %s23, 1
        %s218 = smul.addr %s217, 4
        %s219 = smul.addr %s218, 8
        %s220 = scalar_lea.vmem %s0, %s219
        %p221 = pneg %p44
        %p222 = pneg %p41
        %p223 = scmp.lt.s32.totalorder %s23, 1
        %s224 = scalar_select %p223, %s23, 1
        %s225 = smul.addr %s224, 4
        %s226 = smul.addr %s225, 8
        %s227 = scalar_lea.vmem %s1, %s226
        %p228 = pneg %p70
        %p229 = pneg %p67
        %p230 = pneg %p96
        %p231 = pneg %p93
        %p232 = scmp.lt.s32.totalorder %s23, 1
        %s233 = scalar_select %p232, %s23, 1
        %s234 = smul.addr %s233, 4
        %s235 = smul.addr %s234, 8
        %s236 = scalar_lea.vmem %s2, %s235
        %p237 = pneg %p122
        %p238 = pneg %p119
        %p239 = scmp.lt.s32.totalorder %s23, 1
        %s240 = scalar_select %p239, %s23, 1
        %s241 = smul.addr %s240, 4
        %s242 = smul.addr %s241, 8
        %s243 = scalar_lea.vmem %s3, %s242
        %p244 = pneg %p148
        %p245 = pneg %p145
        %s246 = sand.u32 %s135, 1
        %s247 = scalar_lea.sflag [#allocation3], %s246
        %s248 = sand.u32 %s135, 1
        %s249 = scalar_lea.vmem [#allocation2], %s248
        %p250 = pneg %p174
        %p251 = pneg %p171
        %s252 = sand.u32 %s161, 1
        %s253 = scalar_lea.sflag [#allocation5], %s252
        %s254 = sand.u32 %s161, 1
        %s255 = scalar_lea.vmem [#allocation4], %s254
        %p256 = scmp.lt.s32.totalorder %s23, 1
        %s257 = scalar_select %p256, %s23, 1
        %s258 = smul.addr %s257, 4
        %s259 = smul.addr %s258, 8
        %s260 = scalar_lea.vmem %s0, %s259
        %p261 = scmp.lt.s32.totalorder %s23, 1
        %s262 = scalar_select %p261, %s23, 1
        %s263 = smul.addr %s262, 4
        %s264 = smul.addr %s263, 8
        %s265 = scalar_lea.vmem %s1, %s264
        %p266 = scmp.lt.s32.totalorder %s23, 1
        %s267 = scalar_select %p266, %s23, 1
        %s268 = smul.addr %s267, 4
        %s269 = smul.addr %s268, 8
        %s270 = scalar_lea.vmem %s2, %s269
        %p271 = scmp.lt.s32.totalorder %s23, 1
        %s272 = scalar_select %p271, %s23, 1
        %s273 = smul.addr %s272, 4
        %s274 = smul.addr %s273, 8
        %s275 = scalar_lea.vmem %s3, %s274
        %v276 = vld [vmem:[%s260] sm:$0xff]
        %v277 = vld [vmem:[%s260 + $0x8] sm:$0xff]
        %v278 = vld [vmem:[%s260 + $0x10] sm:$0xff]
        %v279 = vld [vmem:[%s260 + $0x18] sm:$0xff]
        %v280 = vld [vmem:[%s265] sm:$0xff]
        %v281 = vld [vmem:[%s265 + $0x8] sm:$0xff]
        %v282 = vld [vmem:[%s265 + $0x10] sm:$0xff]
        %v283 = vld [vmem:[%s265 + $0x18] sm:$0xff]
        %vm284 = vcmask 64512
        %v285 = vsel %vm284, %v276, 0.0
        %v286 = vsel %vm284, %v277, 0.0
        %v287 = vadd.f32 %v285, %v286
        %v288 = vsel %vm284, %v278, 0.0
        %v289 = vadd.f32 %v287, %v288
        %v290 = vsel %vm284, %v279, 0.0
        %v291 = vadd.f32 %v289, %v290
        %v292 = vrot.slane %v291, 4
        %v293 = vadd.f32 %v291, %v292
        %v294 = vrot.slane %v293, 2
        %v295 = vadd.f32 %v293, %v294
        %v296 = vrot.slane %v295, 1
        %v297 = vadd.f32 %v295, %v296
        %v298 = vmul.f32 %v297, 0.03125
        %v299 = vsub.f32 %v276, %v298
        %v300 = vsub.f32 %v277, %v298
        %v301 = vsub.f32 %v278, %v298
        %v302 = vsub.f32 %v279, %v298
        %v303 = vmul.f32 %v299, %v299
        %v304 = vmul.f32 %v300, %v300
        %v305 = vmul.f32 %v301, %v301
        %v306 = vmul.f32 %v302, %v302
        %v307 = vsel %vm284, %v303, 0.0
        %v308 = vsel %vm284, %v304, 0.0
        %v309 = vadd.f32 %v307, %v308
        %v310 = vsel %vm284, %v305, 0.0
        %v311 = vadd.f32 %v309, %v310
        %v312 = vsel %vm284, %v306, 0.0
        %v313 = vadd.f32 %v311, %v312
        %v314 = vrot.slane %v313, 4
        %v315 = vadd.f32 %v313, %v314
        %v316 = vrot.slane %v315, 2
        %v317 = vadd.f32 %v315, %v316
        %v318 = vrot.slane %v317, 1
        %v319 = vadd.f32 %v317, %v318
        %v320 = vmul.f32 %v319, 0.032258064
        %v321 = vrsqrt.pop %v320
        %v322 = vmul.f32 %v321, %v320
        %v323 = vmul.f32 %v322, %v321
        %v324 = vmul.f32 0.5, %v323
        %v325 = vsub.f32 1.5, %v324
        %v326 = vmul.f32 %v321, %v325
        %vm327 = vweird.f32 %v320
        %vm328 = vweird.f32 %v321
        %vm329 = vmor %vm327, %vm328
        %v330 = vsel %vm329, %v321, %v326
        %v331 = vmul.f32 %v320, %v330
        %vm332 = vcmp.ge.f32.partialorder %v331, 1e-08
        %v333 = vsel %vm332, %v331, 1.0
        %v334 = vsel %vm332, %v330, 1.0
        %v335 = vmul.f32 %v299, %v334
        %v336 = vmul.f32 %v300, %v334
        %v337 = vmul.f32 %v301, %v334
        %v338 = vmul.f32 %v302, %v334
        %339 = vst.msk [vmem:[%s270] sm:$0xff] %vm284, %v335
        %340 = vst.msk [vmem:[%s270 + $0x8] sm:$0xff] %vm284, %v336
        %341 = vst.msk [vmem:[%s270 + $0x10] sm:$0xff] %vm284, %v337
        %342 = vst.msk [vmem:[%s270 + $0x18] sm:$0xff] %vm284, %v338
        %v343 = vmul.f32 %v334, %v334
        %v344 = vmul.f32 %v280, %v343
        %v345 = vmul.f32 %v281, %v343
        %v346 = vmul.f32 %v282, %v343
        %v347 = vmul.f32 %v283, %v343
        %348 = vst.msk [vmem:[%s275] sm:$0xff] %vm284, %v344
        %349 = vst.msk [vmem:[%s275 + $0x8] sm:$0xff] %vm284, %v345
        %350 = vst.msk [vmem:[%s275 + $0x10] sm:$0xff] %vm284, %v346
        %351 = vst.msk [vmem:[%s275 + $0x18] sm:$0xff] %vm284, %v347
        %vm352 = vcmask 57344
        %353 = vst.msk [vmem:[%s249] sm:$0x1] %vm352, %v298
        %354 = vst.msk [vmem:[%s255] sm:$0x1] %vm352, %v333
        %p355 = scmp.lt.s32.totalorder %s23, 1
        %s356 = scalar_select %p355, %s23, 1
        %s357 = smul.addr %s356, 4
        %s358 = smul.addr %s357, 8
        %s359 = scalar_lea.vmem %s2, %s358
        %p360 = scmp.lt.s32.totalorder %s23, 1
        %s361 = scalar_select %p360, %s23, 1
        %s362 = smul.addr %s361, 4
        %s363 = smul.addr %s362, 8
        %s364 = scalar_lea.vmem %s3, %s363
        %s365 = sand.u32 %s135, 1
        %s366 = scalar_lea.sflag [#allocation3], %s365
        %s367 = sand.u32 %s135, 1
        %s368 = scalar_lea.vmem [#allocation2], %s367
        %s369 = sand.u32 %s161, 1
        %s370 = scalar_lea.sflag [#allocation5], %s369
        %s371 = sand.u32 %s161, 1
        %s372 = scalar_lea.vmem [#allocation4], %s371
        // Predicated region
        $region29: #{tpu_custom_call.1} parent=27 // pred_check
          %p373 = pneg %p93
        $region30: #{tpu_custom_call.1} parent=27 // pred_check_branch
          %375 = sbr.rel (%p373) target = $region32
        $region31: #{tpu_custom_call.1} parent=27 // pred_region
          _
        $region32: #{tpu_custom_call.1} parent=27 // pred_fallthru
          _
        // Predicated region
        $region33: #{tpu_custom_call.1} parent=27 // pred_check
          %p376 = pneg %p119
        $region34: #{tpu_custom_call.1} parent=27 // pred_check_branch
          %378 = sbr.rel (%p376) target = $region36
        $region35: #{tpu_custom_call.1} parent=27 // pred_region
          _
        $region36: #{tpu_custom_call.1} parent=27 // pred_fallthru
          _
        // Predicated region
        $region37: #{tpu_custom_call.1} parent=27 // pred_check
          %p379 = pneg %p145
        $region38: #{tpu_custom_call.1} parent=27 // pred_check_branch
          %381 = sbr.rel (%p379) target = $region40
        $region39: #{tpu_custom_call.1} parent=27 // pred_region
          %383 = vsyncadd %s366, 0
          %s384 = scalar_lea.hbm %s4, %s23
          %s386 = sshll.u32 %s368, 4
          %s387 = int_to_ptr.vmem [resolvable:$true] %s386
          %s388 = sshll.u32 %s384, 4
          %s389 = int_to_ptr.hbm [resolvable:$true] %s388
          %391 = dma.vmem_to_hbm [thread:$0]  %s387, 16, %s389, %s366
        $region40: #{tpu_custom_call.1} parent=27 // pred_fallthru
          _
        // Predicated region
        $region41: #{tpu_custom_call.1} parent=27 // pred_check
          %p392 = pneg %p171
        $region42: #{tpu_custom_call.1} parent=27 // pred_check_branch
          %394 = sbr.rel (%p392) target = $region44
        $region43: #{tpu_custom_call.1} parent=27 // pred_region
          %396 = vsyncadd %s370, 0
          %s397 = scalar_lea.hbm %s5, %s23
          %s399 = sshll.u32 %s372, 4
          %s400 = int_to_ptr.vmem [resolvable:$true] %s399
          %s401 = sshll.u32 %s397, 4
          %s402 = int_to_ptr.hbm [resolvable:$true] %s401
          %404 = dma.vmem_to_hbm [thread:$0]  %s400, 16, %s402, %s370
        $region44: #{tpu_custom_call.1} parent=27 // pred_fallthru
          _
      $region28: #{tpu_custom_call.1} parent=5 // pred_fallthru
        _
      %p405 = scmp.le.s32.totalorder 2, %s18
      // Predicated region
      $region45: #{tpu_custom_call.1} parent=5 // pred_check
        %p406 = pneg %p405
      $region46: #{tpu_custom_call.1} parent=5 // pred_check_branch
        %408 = sbr.rel (%p406) target = $region48
      $region47: #{tpu_custom_call.1} parent=5 // pred_region
        %s409 = ssub.s32 %s18, 2
        // Predicated region
        $region49: #{tpu_custom_call.1} parent=47 // pred_check
          %p410 = pneg %p99
        $region50: #{tpu_custom_call.1} parent=47 // pred_check_branch
          %412 = sbr.rel (%p410) target = $region52
        $region51: #{tpu_custom_call.1} parent=47 // pred_region
          %p413 = scmp.lt.s32.totalorder %s24, 1
          %s414 = scalar_select %p413, %s24, 1
          %s415 = smul.addr %s414, 4
          %s416 = smul.addr %s415, 8
          %s417 = scalar_lea.vmem %s2, %s416
        $region52: #{tpu_custom_call.1} parent=47 // pred_fallthru
          _
        // Predicated region
        $region53: #{tpu_custom_call.1} parent=47 // pred_check
          %p418 = pneg %p125
        $region54: #{tpu_custom_call.1} parent=47 // pred_check_branch
          %420 = sbr.rel (%p418) target = $region56
        $region55: #{tpu_custom_call.1} parent=47 // pred_region
          %p421 = scmp.lt.s32.totalorder %s24, 1
          %s422 = scalar_select %p421, %s24, 1
          %s423 = smul.addr %s422, 4
          %s424 = smul.addr %s423, 8
          %s425 = scalar_lea.vmem %s3, %s424
        $region56: #{tpu_custom_call.1} parent=47 // pred_fallthru
          _
        // Predicated region
        $region57: #{tpu_custom_call.1} parent=47 // pred_check
          %p426 = pneg %p151
        $region58: #{tpu_custom_call.1} parent=47 // pred_check_branch
          %428 = sbr.rel (%p426) target = $region60
        $region59: #{tpu_custom_call.1} parent=47 // pred_region
          %s429 = sand.u32 %s136, 1
          %s430 = scalar_lea.sflag [#allocation3], %s429
          %s431 = sand.u32 %s136, 1
          %s432 = scalar_lea.vmem [#allocation2], %s431
          %434 = dma.done %s430, 16
        $region60: #{tpu_custom_call.1} parent=47 // pred_fallthru
          _
        // Predicated region
        $region61: #{tpu_custom_call.1} parent=47 // pred_check
          %p435 = pneg %p177
        $region62: #{tpu_custom_call.1} parent=47 // pred_check_branch
          %437 = sbr.rel (%p435) target = $region64
        $region63: #{tpu_custom_call.1} parent=47 // pred_region
          %s438 = sand.u32 %s162, 1
          %s439 = scalar_lea.sflag [#allocation5], %s438
          %s440 = sand.u32 %s162, 1
          %s441 = scalar_lea.vmem [#allocation4], %s440
          %443 = dma.done %s439, 16
        $region64: #{tpu_custom_call.1} parent=47 // pred_fallthru
          _
      $region48: #{tpu_custom_call.1} parent=5 // pred_fallthru
        _
    $region6: #{tpu_custom_call.1} parent=1 // loop_footer
      %s22 = sadd.s32 1, %s18
    $region7: #{tpu_custom_call.1} parent=1 // loop_footer_branch
      %17 = sbr.rel target = $region3
    $region8: #{tpu_custom_call.1} parent=1 // loop_exit
      _
    %444 = vsyncpa [#allocation3], 1
    %s445 = scalar_lea.sflag [#allocation3], 1
    %446 = vsyncpa %s445, 1
    %447 = vsyncpa [#allocation5], 1
    %s448 = scalar_lea.sflag [#allocation5], 1
    %449 = vsyncpa %s448, 1

</llo_original>
